<compile_context>
chip_gen: v5e
topology: v5e:2x2
jax: 0.10.0
libtpu: 0.0.40
codegen_flags: <defaults>
</compile_context>

<pallas_src>
import functools

import jax
import jax.numpy as jnp
from jax.experimental import pallas as pl
from jax.experimental.pallas import tpu as pltpu


# ---------------------------------------------------------------------------
# Kernel 1: global average + max pooling over H*W (the HBM-bound pass).
# ---------------------------------------------------------------------------
def _pool_kernel(x_ref, avg_ref, max_ref, sum_acc, max_acc, *, inv_hw):
    t = pl.program_id(1)

    @pl.when(t == 0)
    def _():
        sum_acc[...] = jnp.zeros_like(sum_acc)
        max_acc[...] = jnp.full_like(max_acc, -jnp.inf)

    xb = x_ref[0].astype(jnp.float32)                       # [C, hw_tile]
    sum_acc[...] = sum_acc[...] + jnp.sum(xb, axis=-1, keepdims=True)
    max_acc[...] = jnp.maximum(max_acc[...], jnp.max(xb, axis=-1, keepdims=True))

    @pl.when(t == pl.num_programs(1) - 1)
    def _():
        avg_ref[0] = sum_acc[...] * inv_hw                  # [C, 1]
        max_ref[0] = max_acc[...]                           # [C, 1]


# ---------------------------------------------------------------------------
# Kernel 2: bilinear pooling, outer product avg (column) x max (row).
# ---------------------------------------------------------------------------
def _outer_kernel(avg_ref, maxr_ref, o_ref):
    # avg_ref: (1, C, 1)  column;  maxr_ref: (1, 1, C)  row  ->  (1, C, C)
    o_ref[0] = avg_ref[0] * maxr_ref[0]


# ---------------------------------------------------------------------------
# Kernel 3: the 1x1-conv MLP (fc) + sigmoid on the flattened bilinear map.
# ---------------------------------------------------------------------------
def _mlp_kernel(flat_ref, w1_ref, w2_ref, o_ref):
    h = jnp.dot(flat_ref[...], w1_ref[...], preferred_element_type=jnp.float32)
    h = jnp.maximum(h, 0.0)                                 # ReLU
    y = jnp.dot(h, w2_ref[...], preferred_element_type=jnp.float32)
    o_ref[...] = 1.0 / (1.0 + jnp.exp(-y))                  # sigmoid (exp -> EUP)


def _pick_hw_tile(hw, cap=8192):
    """Largest lane-aligned tile: only tile when halves stay multiples of 128."""
    tile = hw
    while tile > cap and tile % 2 == 0 and (tile // 2) % 128 == 0:
        tile //= 2
    return tile


def channel_attention_1(x, w1, w2):
    """x: [B, C, H, W] float32 (NCHW, C = in_planes).
    w1: [hidden, C*C]  (fc[0] 1x1-conv weight, hidden = in_planes**2 // ratio).
    w2: [C, hidden]    (fc[2] 1x1-conv weight).
    Returns sigmoid attention of shape [B, C, 1, 1]."""
    B, C, H, W = x.shape
    hidden = w1.shape[0]
    HW = H * W
    hw_tile = _pick_hw_tile(HW)
    n_t = HW // hw_tile

    x_flat = x.reshape(B, C, HW)        # free reshape: H*W on the lane axis

    # ---- 1. global avg / max pooling over H*W ------------------------------
    avg_col, max_col = pl.pallas_call(
        functools.partial(_pool_kernel, inv_hw=1.0 / HW),
        out_shape=(jax.ShapeDtypeStruct((B, C, 1), jnp.float32),
                   jax.ShapeDtypeStruct((B, C, 1), jnp.float32)),
        grid_spec=pltpu.PrefetchScalarGridSpec(
            num_scalar_prefetch=0,
            grid=(B, n_t),
            in_specs=[pl.BlockSpec((1, C, hw_tile), lambda b, t: (b, 0, t))],
            out_specs=[pl.BlockSpec((1, C, 1), lambda b, t: (b, 0, 0)),
                       pl.BlockSpec((1, C, 1), lambda b, t: (b, 0, 0))],
            scratch_shapes=[pltpu.VMEM((C, 1), jnp.float32),
                            pltpu.VMEM((C, 1), jnp.float32)]),
        compiler_params=pltpu.CompilerParams(
            dimension_semantics=("parallel", "arbitrary"),
            vmem_limit_bytes=32 * 1024 * 1024),
    )(x_flat)

    # ---- 2. bilinear map: avg (column) x max (row) -------------------------
    max_row = max_col.reshape(B, 1, C)  # free reshape (trailing dim is 1)
    outer = pl.pallas_call(
        _outer_kernel,
        out_shape=jax.ShapeDtypeStruct((B, C, C), jnp.float32),
        grid_spec=pltpu.PrefetchScalarGridSpec(
            num_scalar_prefetch=0,
            grid=(B,),
            in_specs=[pl.BlockSpec((1, C, 1), lambda b: (b, 0, 0)),
                      pl.BlockSpec((1, 1, C), lambda b: (b, 0, 0))],
            out_specs=pl.BlockSpec((1, C, C), lambda b: (b, 0, 0))),
        compiler_params=pltpu.CompilerParams(
            dimension_semantics=("parallel",)),
    )(avg_col, max_row)

    # ---- 3. fc (two 1x1 convs) + sigmoid ------------------------------------
    flat = outer.reshape(B, C * C)                    # free reshape
    # fold the /C^2 normalization of bi_out into the bias-free first FC weight
    w1_folded = (w1.astype(jnp.float32) / float(C * C)).T     # [C*C, hidden]
    w2_t = w2.astype(jnp.float32).T                           # [hidden, C]

    y = pl.pallas_call(
        _mlp_kernel,
        out_shape=jax.ShapeDtypeStruct((B, C), jnp.float32),
        grid_spec=pltpu.PrefetchScalarGridSpec(
            num_scalar_prefetch=0,
            grid=(1,),
            in_specs=[pl.BlockSpec((B, C * C), lambda i: (0, 0)),
                      pl.BlockSpec((C * C, hidden), lambda i: (0, 0)),
                      pl.BlockSpec((hidden, C), lambda i: (0, 0))],
            out_specs=pl.BlockSpec((B, C), lambda i: (0, 0))),
        compiler_params=pltpu.CompilerParams(
            dimension_semantics=("arbitrary",)),
    )(flat, w1_folded, w2_t)

    return y.reshape(B, C, 1, 1)


# ---------------------------------------------------------------------------
# Plain-JAX reference mirroring the PyTorch forward.
# ---------------------------------------------------------------------------
def reference(x, w1, w2):
    B, C, H, W = x.shape
    avg = jnp.mean(x, axis=(2, 3))                       # [B, C]
    mx = jnp.max(x, axis=(2, 3))                         # [B, C]
    bi = (avg[:, :, None] * mx[:, None, :]) / (C * C)    # [B, C, C]
    flat = bi.reshape(B, C * C)
    h = jnp.maximum(flat @ w1.T, 0.0)
    out = h @ w2.T
    return (1.0 / (1.0 + jnp.exp(-out))).reshape(B, C, 1, 1)


if __name__ == "__main__":
    key = jax.random.PRNGKey(0)
    B, in_planes, H, W, ratio = 2, 16, 16, 16, 16
    C = in_planes
    hidden = (in_planes ** 2) // ratio                   # 16
    k1, k2, k3 = jax.random.split(key, 3)

    x = jax.random.normal(k1, (B, C, H, W), jnp.float32)
    w1 = 0.1 * jax.random.normal(k2, (hidden, C * C), jnp.float32)   # fc[0] weight
    w2 = 0.1 * jax.random.normal(k3, (C, hidden), jnp.float32)       # fc[2] weight

    out = jax.block_until_ready(channel_attention_1(x, w1, w2))
    ref = reference(x, w1, w2)

    assert out.shape == (B, C, 1, 1), out.shape
    max_err = float(jnp.max(jnp.abs(out - ref)))
    assert jnp.allclose(out, ref, atol=1e-4, rtol=1e-4), max_err
    print("KERNEL_OK")
</pallas_src>

<mosaic_0001>
module attributes {stable_mosaic.version = 11 : i64} {
  func.func @_pool_kernel(%arg0: i32, %arg1: i32, %arg2: memref<1x16x256xf32, #tpu.memory_space<vmem>>, %arg3: memref<1x16x1xf32, #tpu.memory_space<vmem>>, %arg4: memref<1x16x1xf32, #tpu.memory_space<vmem>>, %arg5: memref<16x1xf32, #tpu.memory_space<vmem>>, %arg6: memref<16x1xf32, #tpu.memory_space<vmem>>) attributes {dimension_semantics = [#tpu.dimension_semantics<parallel>, #tpu.dimension_semantics<arbitrary>], iteration_bounds = array<i64: 2, 1>, scalar_prefetch = 0 : i64, scratch_operands = 2 : i64, tpu.core_type = #tpu.core_type<tc>, window_params = [{transform_indices = @transform_0, window_bounds = array<i64: 1, 16, 256>}, {transform_indices = @transform_1, window_bounds = array<i64: 1, 16, 1>}, {transform_indices = @transform_2, window_bounds = array<i64: 1, 16, 1>}]} {
    %c0_i32 = arith.constant 0 : i32
    %0 = arith.cmpi eq, %arg1, %c0_i32 : i32
    %1 = arith.extui %0 : i1 to i32
    %c0_i32_0 = arith.constant 0 : i32
    %2 = arith.cmpi ne, %1, %c0_i32_0 : i32
    scf.if %2 {
      %cst_14 = arith.constant 0.000000e+00 : f32
      %18 = vector.broadcast %cst_14 : f32 to vector<16x1xf32>
      %c0_15 = arith.constant 0 : index
      %c0_16 = arith.constant 0 : index
      %19 = vector.load %arg5[%c0_15, %c0_16] : memref<16x1xf32, #tpu.memory_space<vmem>>, vector<16x1xf32>
      tpu.vector_store %arg5[%c0_15, %c0_16], %18 {strides = array<i32>} : memref<16x1xf32, #tpu.memory_space<vmem>>, vector<16x1xf32>,
      %cst_17 = arith.constant 0xFF800000 : f32
      %20 = vector.broadcast %cst_17 : f32 to vector<16x1xf32>
      %c0_18 = arith.constant 0 : index
      %c0_19 = arith.constant 0 : index
      %21 = vector.load %arg6[%c0_18, %c0_19] : memref<16x1xf32, #tpu.memory_space<vmem>>, vector<16x1xf32>
      tpu.vector_store %arg6[%c0_18, %c0_19], %20 {strides = array<i32>} : memref<16x1xf32, #tpu.memory_space<vmem>>, vector<16x1xf32>,
    } else {
    }
    %c0 = arith.constant 0 : index
    %c0_1 = arith.constant 0 : index
    %c0_2 = arith.constant 0 : index
    %3 = vector.load %arg2[%c0, %c0_1, %c0_2] : memref<1x16x256xf32, #tpu.memory_space<vmem>>, vector<1x16x256xf32>
    %4 = vector.shape_cast %3 : vector<1x16x256xf32> to vector<16x256xf32>
    %c0_3 = arith.constant 0 : index
    %c0_4 = arith.constant 0 : index
    %5 = vector.load %arg5[%c0_3, %c0_4] : memref<16x1xf32, #tpu.memory_space<vmem>>, vector<16x1xf32>
    %cst = arith.constant dense<0.000000e+00> : vector<16xf32>
    %6 = vector.multi_reduction <add>, %4, %cst [1] : vector<16x256xf32> to vector<16xf32>
    %7 = vector.shape_cast %6 : vector<16xf32> to vector<16x1xf32>
    %8 = arith.addf %5, %7 : vector<16x1xf32>
    %c0_5 = arith.constant 0 : index
    %c0_6 = arith.constant 0 : index
    %9 = vector.load %arg5[%c0_5, %c0_6] : memref<16x1xf32, #tpu.memory_space<vmem>>, vector<16x1xf32>
    tpu.vector_store %arg5[%c0_5, %c0_6], %8 {strides = array<i32>} : memref<16x1xf32, #tpu.memory_space<vmem>>, vector<16x1xf32>,
    %c0_7 = arith.constant 0 : index
    %c0_8 = arith.constant 0 : index
    %10 = vector.load %arg6[%c0_7, %c0_8] : memref<16x1xf32, #tpu.memory_space<vmem>>, vector<16x1xf32>
    %cst_9 = arith.constant dense<0xFF800000> : vector<16xf32>
    %11 = vector.multi_reduction <maximumf>, %4, %cst_9 [1] : vector<16x256xf32> to vector<16xf32>
    %12 = vector.shape_cast %11 : vector<16xf32> to vector<16x1xf32>
    %13 = arith.maximumf %10, %12 : vector<16x1xf32>
    %c0_10 = arith.constant 0 : index
    %c0_11 = arith.constant 0 : index
    %14 = vector.load %arg6[%c0_10, %c0_11] : memref<16x1xf32, #tpu.memory_space<vmem>>, vector<16x1xf32>
    tpu.vector_store %arg6[%c0_10, %c0_11], %13 {strides = array<i32>} : memref<16x1xf32, #tpu.memory_space<vmem>>, vector<16x1xf32>,
    %c0_i32_12 = arith.constant 0 : i32
    %15 = arith.cmpi eq, %arg1, %c0_i32_12 : i32
    %16 = arith.extui %15 : i1 to i32
    %c0_i32_13 = arith.constant 0 : i32
    %17 = arith.cmpi ne, %16, %c0_i32_13 : i32
    scf.if %17 {
      %c0_14 = arith.constant 0 : index
      %c0_15 = arith.constant 0 : index
      %18 = vector.load %arg5[%c0_14, %c0_15] : memref<16x1xf32, #tpu.memory_space<vmem>>, vector<16x1xf32>
      %cst_16 = arith.constant 3.906250e-03 : f32
      %19 = vector.broadcast %cst_16 : f32 to vector<16x1xf32>
      %20 = arith.mulf %18, %19 : vector<16x1xf32>
      %c0_17 = arith.constant 0 : index
      %c0_18 = arith.constant 0 : index
      %c0_19 = arith.constant 0 : index
      %21 = vector.load %arg3[%c0_17, %c0_18, %c0_19] : memref<1x16x1xf32, #tpu.memory_space<vmem>>, vector<1x16x1xf32>
      %22 = vector.shape_cast %21 : vector<1x16x1xf32> to vector<16x1xf32>
      %23 = vector.shape_cast %20 : vector<16x1xf32> to vector<1x16x1xf32>
      tpu.vector_store %arg3[%c0_17, %c0_18, %c0_19], %23 {strides = array<i32>} : memref<1x16x1xf32, #tpu.memory_space<vmem>>, vector<1x16x1xf32>,
      %c0_20 = arith.constant 0 : index
      %c0_21 = arith.constant 0 : index
      %24 = vector.load %arg6[%c0_20, %c0_21] : memref<16x1xf32, #tpu.memory_space<vmem>>, vector<16x1xf32>
      %c0_22 = arith.constant 0 : index
      %c0_23 = arith.constant 0 : index
      %c0_24 = arith.constant 0 : index
      %25 = vector.load %arg4[%c0_22, %c0_23, %c0_24] : memref<1x16x1xf32, #tpu.memory_space<vmem>>, vector<1x16x1xf32>
      %26 = vector.shape_cast %25 : vector<1x16x1xf32> to vector<16x1xf32>
      %27 = vector.shape_cast %24 : vector<16x1xf32> to vector<1x16x1xf32>
      tpu.vector_store %arg4[%c0_22, %c0_23, %c0_24], %27 {strides = array<i32>} : memref<1x16x1xf32, #tpu.memory_space<vmem>>, vector<1x16x1xf32>,
    } else {
    }
    return
  }
  func.func @transform_0(%arg0: i32, %arg1: i32) -> (i32, i32, i32) {
    %c0_i32 = arith.constant 0 : i32
    %c0_i32_0 = arith.constant 0 : i32
    return %arg0, %c0_i32, %arg1 : i32, i32, i32
  }
  func.func @transform_1(%arg0: i32, %arg1: i32) -> (i32, i32, i32) {
    %c0_i32 = arith.constant 0 : i32
    %c0_i32_0 = arith.constant 0 : i32
    %c0_i32_1 = arith.constant 0 : i32
    return %arg0, %c0_i32, %c0_i32_0 : i32, i32, i32
  }
  func.func @transform_2(%arg0: i32, %arg1: i32) -> (i32, i32, i32) {
    %c0_i32 = arith.constant 0 : i32
    %c0_i32_0 = arith.constant 0 : i32
    %c0_i32_1 = arith.constant 0 : i32
    return %arg0, %c0_i32, %c0_i32_0 : i32, i32, i32
  }
}

</mosaic_0001>

<llo_original>
// kernel: tpu_custom_call.1
$region0: #{tpu_custom_call.1}
  #allocation0 [shape = 'u32[]', space=smem, size = 0x4, offset = 0x4, fixed_abs, tag = 'smem constant byte address 0x4 - core index']
  #allocation1 [shape = 'u32[72,128]{1,0:T(1,128)}', space=vmem, size = 0x9000, scoped, tag = 'internal scratch']
  #allocation2 [shape = 'f32[16,1]{1,0:T(8,128)}', space=vmem, size = 0x2000, scoped, tag = 'scratch operand']
  #allocation3 [shape = 'f32[16,1]{1,0:T(8,128)}', space=vmem, size = 0x2000, scoped, tag = 'scratch operand']
  %s0 = inlined_call_operand.hbm [shape: f32[2,16,256], index: 0, kind: input, shape index: {}]
  %s1 = inlined_call_operand.vmem [shape: f32[2,16,1], index: 1, kind: output, shape index: {0}]
  %s2 = inlined_call_operand.vmem [shape: f32[2,16,1], index: 2, kind: output, shape index: {1}]
  %3 = xla_tuple %s1, %s2
  %s4 = sld [smem:[#allocation0]]
  $region57: #{tpu_custom_call.1} parent=0
    _
  %s6 = ssub.s32 1, %s4
  %s7 = scalar_select 0, %s6, %s4
  $region1: #{tpu_custom_call.1} parent=0
    #allocation4 [shape = 'u8[32768]{0}', space=vmem, size = 0x8000, scoped, tag = 'input window, operand 0']
    #allocation5 [shape = 's32[2]{0}', space=sflag, size = 0x8, scoped, tag = 'scoped memory for tpu_custom_call.1']
    %8 = vsyncpa [#allocation5], 0
    %s9 = scalar_lea.sflag [#allocation5], 1
    %10 = vsyncpa %s9, 0
    loop: start=0, step=1, limit=4
    $region2: #{tpu_custom_call.1} parent=1 // loop_pre_header
      _
    $region3: #{tpu_custom_call.1} parent=1 // loop_header
      %s12 = sphi 0, %s16
      %p13 = scmp.ge.s32.totalorder %s12, 4
      %s19 = sphi 0, %s31
      %s20 = sphi 0, %s27
      %s21 = sphi 0, %s19
      %s22 = sphi 0, %s20
      %s23 = sphi 0, %s21
      %s24 = sphi 0, %s22
      %s36 = sphi 0, %s38
      %s39 = sphi 0, %s36
      %s40 = sphi 0, %s39
      %s56 = sphi 0, %s40
      %s62 = sphi 0, %s64
      %s65 = sphi 0, %s62
      %s66 = sphi 0, %s65
      %s82 = sphi 0, %s66
      %s88 = sphi 0, %s90
      %s91 = sphi 0, %s88
      %s92 = sphi 0, %s91
      %s108 = sphi 0, %s92
    $region4: #{tpu_custom_call.1} parent=1 // loop_header_branch
      %15 = sbr.rel (%p13) target = $region8
    $region5: #{tpu_custom_call.1} parent=1 // loop_body
      %s17 = ssub.s32 %s12, 1
      %s18 = ssub.s32 %s12, 2
      %s25 = sadd.s32 1, %s20
      %p26 = scmp.ge.s32.totalorder %s25, 1
      %s27 = scalar_select %p26, 0, %s25
      %s28 = sadd.s32 1, %s19
      %s29 = scalar_select %p26, %s28, %s19
      %p30 = scmp.ge.s32.totalorder %s29, 2
      %s31 = scalar_select %p30, 0, %s29
      %s32 = ssub.s32 %s19, %s31
      %s33 = ssub.s32 %s20, %s27
      %s34 = sor.u32 %s32, %s33
      %p35 = scmp.eq.s32.totalorder %s34, 0
      %s37 = sadd.s32 %s36, 1
      %s38 = scalar_select %p35, %s36, %s37
      %p41 = pneg %p35
      %p42 = scmp.eq.s32.totalorder %s12, 1
      %p43 = por %p41, %p42
      %p44 = scmp.ne.s32.totalorder %s36, %s39
      %p45 = scmp.eq.s32.totalorder %s12, 0
      %p46 = por %p44, %p45
      %p47 = scmp.ne.s32.totalorder %s36, %s39
      %p48 = scmp.eq.s32.totalorder %s17, 1
      %p49 = por %p47, %p48
      %p50 = scmp.ne.s32.totalorder %s39, %s40
      %p51 = scmp.eq.s32.totalorder %s17, 0
      %p52 = por %p50, %p51
      %p53 = scmp.ne.s32.totalorder %s39, %s40
      %p54 = scmp.eq.s32.totalorder %s18, 1
      %p55 = por %p53, %p54
      %p57 = scmp.ne.s32.totalorder %s40, %s56
      %p58 = scmp.eq.s32.totalorder %s18, 0
      %p59 = por %p57, %p58
      %s60 = ssub.s32 %s19, %s31
      %p61 = scmp.eq.s32.totalorder %s60, 0
      %s63 = sadd.s32 %s62, 1
      %s64 = scalar_select %p61, %s62, %s63
      %p67 = pneg %p61
      %p68 = scmp.eq.s32.totalorder %s12, 1
      %p69 = por %p67, %p68
      %p70 = scmp.ne.s32.totalorder %s62, %s65
      %p71 = scmp.eq.s32.totalorder %s12, 0
      %p72 = por %p70, %p71
      %p73 = scmp.ne.s32.totalorder %s62, %s65
      %p74 = scmp.eq.s32.totalorder %s17, 1
      %p75 = por %p73, %p74
      %p76 = scmp.ne.s32.totalorder %s65, %s66
      %p77 = scmp.eq.s32.totalorder %s17, 0
      %p78 = por %p76, %p77
      %p79 = scmp.ne.s32.totalorder %s65, %s66
      %p80 = scmp.eq.s32.totalorder %s18, 1
      %p81 = por %p79, %p80
      %p83 = scmp.ne.s32.totalorder %s66, %s82
      %p84 = scmp.eq.s32.totalorder %s18, 0
      %p85 = por %p83, %p84
      %s86 = ssub.s32 %s19, %s31
      %p87 = scmp.eq.s32.totalorder %s86, 0
      %s89 = sadd.s32 %s88, 1
      %s90 = scalar_select %p87, %s88, %s89
      %p93 = pneg %p87
      %p94 = scmp.eq.s32.totalorder %s12, 1
      %p95 = por %p93, %p94
      %p96 = scmp.ne.s32.totalorder %s88, %s91
      %p97 = scmp.eq.s32.totalorder %s12, 0
      %p98 = por %p96, %p97
      %p99 = scmp.ne.s32.totalorder %s88, %s91
      %p100 = scmp.eq.s32.totalorder %s17, 1
      %p101 = por %p99, %p100
      %p102 = scmp.ne.s32.totalorder %s91, %s92
      %p103 = scmp.eq.s32.totalorder %s17, 0
      %p104 = por %p102, %p103
      %p105 = scmp.ne.s32.totalorder %s91, %s92
      %p106 = scmp.eq.s32.totalorder %s18, 1
      %p107 = por %p105, %p106
      %p109 = scmp.ne.s32.totalorder %s92, %s108
      %p110 = scmp.eq.s32.totalorder %s18, 0
      %p111 = por %p109, %p110
      %p112 = scmp.le.s32.totalorder 1, %s12
      %p113 = scmp.lt.s32.totalorder %s12, 3
      %p114 = pnand %p112, %p113
      %p115 = pneg %p114
      // Predicated region
      $region9: #{tpu_custom_call.1} parent=5 // pred_check
        _
      $region10: #{tpu_custom_call.1} parent=5 // pred_check_branch
        %117 = sbr.rel (%p114) target = $region12
      $region11: #{tpu_custom_call.1} parent=5 // pred_region
        %s118 = ssub.s32 %s12, 1
      $region12: #{tpu_custom_call.1} parent=5 // pred_fallthru
        _
      %p119 = scmp.lt.s32.totalorder %s12, 2
      // Predicated region
      $region13: #{tpu_custom_call.1} parent=5 // pred_check
        %p120 = pneg %p119
      $region14: #{tpu_custom_call.1} parent=5 // pred_check_branch
        %122 = sbr.rel (%p120) target = $region16
      $region15: #{tpu_custom_call.1} parent=5 // pred_region
        // Predicated region
        $region17: #{tpu_custom_call.1} parent=15 // pred_check
          %p123 = pneg %p46
        $region18: #{tpu_custom_call.1} parent=15 // pred_check_branch
          %125 = sbr.rel (%p123) target = $region20
        $region19: #{tpu_custom_call.1} parent=15 // pred_region
          %s126 = sand.u32 %s36, 1
          %s127 = scalar_lea.sflag [#allocation5], %s126
          %s128 = sand.u32 %s36, 1
          %s129 = smul.addr %s128, 32
          %s130 = scalar_lea.vmem [#allocation4], %s129
          %s131 = smul.u32 2, %s20
          %133 = vsyncadd %s127, 0
          %s134 = smul.addr %s19, 4
          %s135 = sadd.s32 %s131, %s134
          %s136 = smul.addr %s135, 8
          %s137 = scalar_lea.hbm %s0, %s136
          %s138 = sshll.u32 %s137, 4
          %s139 = int_to_ptr.hbm [resolvable:$true] %s138
          %s140 = sshll.u32 %s130, 4
          %s141 = int_to_ptr.vmem [resolvable:$true] %s140
          %146 = dma.hbm_to_vmem [thread:$0]  %s139, 512, %s141, %s127, 256, 256, 16
        $region20: #{tpu_custom_call.1} parent=15 // pred_fallthru
          _
      $region16: #{tpu_custom_call.1} parent=5 // pred_fallthru
        _
      %p147 = scmp.le.s32.totalorder 1, %s12
      %p148 = scmp.lt.s32.totalorder %s12, 3
      %p149 = pnand %p147, %p148
      %p150 = pneg %p149
      // Predicated region
      $region21: #{tpu_custom_call.1} parent=5 // pred_check
        _
      $region22: #{tpu_custom_call.1} parent=5 // pred_check_branch
        %152 = sbr.rel (%p149) target = $region24
      $region23: #{tpu_custom_call.1} parent=5 // pred_region
        %s153 = ssub.s32 %s12, 1
        %s154 = sand.u32 %s39, 1
        %s155 = scalar_lea.sflag [#allocation5], %s154
        %s156 = sand.u32 %s39, 1
        %s157 = smul.addr %s156, 32
        %s158 = scalar_lea.vmem [#allocation4], %s157
        // Predicated region
        $region25: #{tpu_custom_call.1} parent=23 // pred_check
          %p159 = pneg %p52
        $region26: #{tpu_custom_call.1} parent=23 // pred_check_branch
          %161 = sbr.rel (%p159) target = $region28
        $region27: #{tpu_custom_call.1} parent=23 // pred_region
          %163 = dma.done %s155, 512
        $region28: #{tpu_custom_call.1} parent=23 // pred_fallthru
          _
        %s164 = sand.u32 %s39, 1
        %s165 = scalar_lea.sflag [#allocation5], %s164
        %s166 = sand.u32 %s39, 1
        %s167 = smul.addr %s166, 32
        %s168 = scalar_lea.vmem [#allocation4], %s167
        %p169 = pneg %p52
        %p170 = pneg %p49
        %p171 = pneg %p78
        %p172 = pneg %p75
        %p173 = scmp.lt.s32.totalorder %s21, 1
        %s174 = scalar_select %p173, %s21, 1
        %s175 = smul.addr %s174, 2
        %s176 = smul.addr %s175, 8
        %s177 = scalar_lea.vmem %s1, %s176
        %p178 = pneg %p104
        %p179 = pneg %p101
        %p180 = scmp.lt.s32.totalorder %s21, 1
        %s181 = scalar_select %p180, %s21, 1
        %s182 = smul.addr %s181, 2
        %s183 = smul.addr %s182, 8
        %s184 = scalar_lea.vmem %s2, %s183
        %s185 = smul.u32 2, %s22
        %p186 = scmp.lt.s32.totalorder %s21, 1
        %s187 = scalar_select %p186, %s21, 1
        %s188 = smul.addr %s187, 2
        %s189 = smul.addr %s188, 8
        %s190 = scalar_lea.vmem %s1, %s189
        %p191 = scmp.lt.s32.totalorder %s21, 1
        %s192 = scalar_select %p191, %s21, 1
        %s193 = smul.addr %s192, 2
        %s194 = smul.addr %s193, 8
        %s195 = scalar_lea.vmem %s2, %s194
        %p196 = scmp.eq.s32.totalorder %s22, 0
        // Predicated region
        $region29: #{tpu_custom_call.1} parent=23 // pred_check
          %p197 = pneg %p196
        $region30: #{tpu_custom_call.1} parent=23 // pred_check_branch
          %199 = sbr.rel (%p197) target = $region32
        $region31: #{tpu_custom_call.1} parent=23 // pred_region
          %vm200 = vcmask 7168
          %201 = vst.msk [vmem:[#allocation2] sm:$0xff] %vm200, 0.0
          %202 = vst.msk [vmem:[#allocation2 + $0x8] sm:$0xff] %vm200, 0.0
          %203 = vst.msk [vmem:[#allocation3] sm:$0xff] %vm200, -inf
          %204 = vst.msk [vmem:[#allocation3 + $0x8] sm:$0xff] %vm200, -inf
        $region32: #{tpu_custom_call.1} parent=23 // pred_fallthru
          _
        %v205 = vld [vmem:[%s158] sm:$0xff]
        %v206 = vld [vmem:[%s158 + $0x8] sm:$0xff]
        %v207 = vld [vmem:[%s158 + $0x10] sm:$0xff]
        %v208 = vld [vmem:[%s158 + $0x18] sm:$0xff]
        %v209 = vld [vmem:[#allocation2] sm:$0xff]
        %v210 = vld [vmem:[#allocation2 + $0x8] sm:$0xff]
        %v211 = vadd.f32 %v205, %v206
        %212 = vadd.xlane.f32.xlu0 %v211
        %v213 = vpop.xlane.xlu0 %212
        %v214 = vadd.f32 %v207, %v208
        %215 = vadd.xlane.f32.xlu0 %v214
        %v216 = vpop.xlane.xlu0 %215
        %v217 = vadd.f32 %v209, %v213
        %v218 = vadd.f32 %v210, %v216
        %vm219 = vcmask 7168
        %220 = vst.msk [vmem:[#allocation2] sm:$0xff] %vm219, %v217
        %221 = vst.msk [vmem:[#allocation2 + $0x8] sm:$0xff] %vm219, %v218
        %v222 = vld [vmem:[#allocation3] sm:$0xff]
        %v223 = vld [vmem:[#allocation3 + $0x8] sm:$0xff]
        %v224 = vmax.f32 %v205, %v206
        %225 = vmax.xlane.f32.xlu0 %v224
        %v226 = vpop.xlane.xlu0 %225
        %v227 = vmax.f32 %v207, %v208
        %228 = vmax.xlane.f32.xlu0 %v227
        %v229 = vpop.xlane.xlu0 %228
        %v230 = vmax.f32 %v222, %v226
        %v231 = vmax.f32 %v223, %v229
        %232 = vst.msk [vmem:[#allocation3] sm:$0xff] %vm219, %v230
        %233 = vst.msk [vmem:[#allocation3 + $0x8] sm:$0xff] %vm219, %v231
        // Predicated region
        $region33: #{tpu_custom_call.1} parent=23 // pred_check
          %p234 = pneg %p196
        $region34: #{tpu_custom_call.1} parent=23 // pred_check_branch
          %236 = sbr.rel (%p234) target = $region36
        $region35: #{tpu_custom_call.1} parent=23 // pred_region
          %v237 = vld [vmem:[#allocation2] sm:$0xff]
          %v238 = vld [vmem:[#allocation2 + $0x8] sm:$0xff]
          %v239 = vmul.f32 %v237, 0.00390625
          %v240 = vmul.f32 %v238, 0.00390625
          %241 = vst.msk [vmem:[%s190] sm:$0xff] %vm219, %v239
          %242 = vst.msk [vmem:[%s190 + $0x8] sm:$0xff] %vm219, %v240
          %v243 = vld [vmem:[#allocation3] sm:$0xff]
          %v244 = vld [vmem:[#allocation3 + $0x8] sm:$0xff]
          %245 = vst.msk [vmem:[%s195] sm:$0xff] %vm219, %v243
          %246 = vst.msk [vmem:[%s195 + $0x8] sm:$0xff] %vm219, %v244
        $region36: #{tpu_custom_call.1} parent=23 // pred_fallthru
          _
        %p247 = scmp.lt.s32.totalorder %s21, 1
        %s248 = scalar_select %p247, %s21, 1
        %s249 = smul.addr %s248, 2
        %s250 = smul.addr %s249, 8
        %s251 = scalar_lea.vmem %s1, %s250
        %p252 = scmp.lt.s32.totalorder %s21, 1
        %s253 = scalar_select %p252, %s21, 1
        %s254 = smul.addr %s253, 2
        %s255 = smul.addr %s254, 8
        %s256 = scalar_lea.vmem %s2, %s255
        // Predicated region
        $region37: #{tpu_custom_call.1} parent=23 // pred_check
          %p257 = pneg %p75
        $region38: #{tpu_custom_call.1} parent=23 // pred_check_branch
          %259 = sbr.rel (%p257) target = $region40
        $region39: #{tpu_custom_call.1} parent=23 // pred_region
          _
        $region40: #{tpu_custom_call.1} parent=23 // pred_fallthru
          _
        // Predicated region
        $region41: #{tpu_custom_call.1} parent=23 // pred_check
          %p260 = pneg %p101
        $region42: #{tpu_custom_call.1} parent=23 // pred_check_branch
          %262 = sbr.rel (%p260) target = $region44
        $region43: #{tpu_custom_call.1} parent=23 // pred_region
          _
        $region44: #{tpu_custom_call.1} parent=23 // pred_fallthru
          _
      $region24: #{tpu_custom_call.1} parent=5 // pred_fallthru
        _
      %p263 = scmp.le.s32.totalorder 2, %s12
      // Predicated region
      $region45: #{tpu_custom_call.1} parent=5 // pred_check
        %p264 = pneg %p263
      $region46: #{tpu_custom_call.1} parent=5 // pred_check_branch
        %266 = sbr.rel (%p264) target = $region48
      $region47: #{tpu_custom_call.1} parent=5 // pred_region
        %s267 = ssub.s32 %s12, 2
        // Predicated region
        $region49: #{tpu_custom_call.1} parent=47 // pred_check
          %p268 = pneg %p81
        $region50: #{tpu_custom_call.1} parent=47 // pred_check_branch
          %270 = sbr.rel (%p268) target = $region52
        $region51: #{tpu_custom_call.1} parent=47 // pred_region
          %p271 = scmp.lt.s32.totalorder %s23, 1
          %s272 = scalar_select %p271, %s23, 1
          %s273 = smul.addr %s272, 2
          %s274 = smul.addr %s273, 8
          %s275 = scalar_lea.vmem %s1, %s274
        $region52: #{tpu_custom_call.1} parent=47 // pred_fallthru
          _
        // Predicated region
        $region53: #{tpu_custom_call.1} parent=47 // pred_check
          %p276 = pneg %p107
        $region54: #{tpu_custom_call.1} parent=47 // pred_check_branch
          %278 = sbr.rel (%p276) target = $region56
        $region55: #{tpu_custom_call.1} parent=47 // pred_region
          %p279 = scmp.lt.s32.totalorder %s23, 1
          %s280 = scalar_select %p279, %s23, 1
          %s281 = smul.addr %s280, 2
          %s282 = smul.addr %s281, 8
          %s283 = scalar_lea.vmem %s2, %s282
        $region56: #{tpu_custom_call.1} parent=47 // pred_fallthru
          _
      $region48: #{tpu_custom_call.1} parent=5 // pred_fallthru
        _
    $region6: #{tpu_custom_call.1} parent=1 // loop_footer
      %s16 = sadd.s32 1, %s12
    $region7: #{tpu_custom_call.1} parent=1 // loop_footer_branch
      %11 = sbr.rel target = $region3
    $region8: #{tpu_custom_call.1} parent=1 // loop_exit
      _
    %284 = vsyncpa [#allocation5], 1
    %s285 = scalar_lea.sflag [#allocation5], 1
    %286 = vsyncpa %s285, 1

</llo_original>
